<compile_context>
chip_gen: v6e
topology: v6e:2x2x1
jax: 0.10.0
libtpu: 0.0.40
codegen_flags: <defaults>
</compile_context>

<pallas_src>
import math

import jax
import jax.numpy as jnp
from jax.experimental import pallas as pl
from jax.experimental.pallas import tpu as pltpu

_MASK_FILL = jnp.float32(-1e9)      # matches torch masked_fill_(mask, -1000000000.0)
_NEG_OFFBLOCK = jnp.float32(-1e30)  # kills cross-head blocks of the stacked score matrix


def sdp_kernel(q_ref, k_ref, v_ref, m_ref, o_ref):
    # q_ref: (1, H*Lq, d_k), k_ref: (1, H*Lk, d_k), v_ref: (1, H*Lk, d_v)
    # m_ref: (1, H*Lq, H*Lk) float32 "mask value" tensor:
    #        0.0        -> keep raw score
    #        -1e9       -> user-masked position (masked_fill semantics)
    #        -1e30      -> cross-head position of the stacked score matrix
    d_k = q_ref.shape[-1]
    scale = jnp.float32(1.0 / math.sqrt(d_k))

    q = q_ref[0] * scale            # fold 1/sqrt(d_k) into q (d_k cols, not H*L)
    k = k_ref[0]
    v = v_ref[0]
    mv = m_ref[0]

    # One MXU matmul for ALL heads: (H*Lq, d_k) . (H*Lk, d_k)^T -> (H*Lq, H*Lk)
    raw = jax.lax.dot_general(
        q, k, (((1,), (1,)), ((), ())), preferred_element_type=jnp.float32)

    # masked_fill_ (replace, not add) + block-diagonal head restriction.
    s = jnp.where(mv != 0.0, mv, raw)

    # Numerically stable softmax over the key dimension.
    s = s - jnp.max(s, axis=-1, keepdims=True)
    p = jnp.exp(s)
    p = p * pl.reciprocal(jnp.sum(p, axis=-1, keepdims=True), approx=False)

    # (H*Lq, H*Lk) . (H*Lk, d_v) -> (H*Lq, d_v); cross-head probs are exactly 0.
    o_ref[0] = jnp.dot(p, v, preferred_element_type=jnp.float32)


@jax.jit
def _sdp_pallas(q2, k2, v2, maskval):
    B, HLq, d_k = q2.shape
    _, HLk, _ = k2.shape
    d_v = v2.shape[-1]
    grid_spec = pltpu.PrefetchScalarGridSpec(
        num_scalar_prefetch=0,
        grid=(B,),
        in_specs=[
            pl.BlockSpec((1, HLq, d_k), lambda b: (b, 0, 0)),
            pl.BlockSpec((1, HLk, d_k), lambda b: (b, 0, 0)),
            pl.BlockSpec((1, HLk, d_v), lambda b: (b, 0, 0)),
            pl.BlockSpec((1, HLq, HLk), lambda b: (b, 0, 0)),
        ],
        out_specs=pl.BlockSpec((1, HLq, d_v), lambda b: (b, 0, 0)),
    )
    return pl.pallas_call(
        sdp_kernel,
        out_shape=jax.ShapeDtypeStruct((B, HLq, d_v), jnp.float32),
        grid_spec=grid_spec,
        compiler_params=pltpu.CompilerParams(
            dimension_semantics=("parallel",)),
    )(q2, k2, v2, maskval)


def _build_maskval(mask, B, H, Lq, Lk):
    """(B, H*Lq, H*Lk) float32: 0 keep, -1e9 user-masked, -1e30 cross-head."""
    inblock = jnp.kron(jnp.eye(H, dtype=jnp.float32),
                       jnp.ones((Lq, Lk), jnp.float32)) > 0           # (H*Lq, H*Lk)
    base = jnp.where(inblock, jnp.float32(0.0), _NEG_OFFBLOCK)
    base = jnp.broadcast_to(base, (B, H * Lq, H * Lk))
    if mask is None:
        return base.astype(jnp.float32)
    m = jnp.broadcast_to(mask.astype(bool), (B, H, Lq, Lk))
    eye = jnp.eye(H, dtype=bool)
    big = m[:, :, :, None, :] & eye[None, :, None, :, None]           # (B,H,Lq,H,Lk)
    big = big.reshape(B, H * Lq, H * Lk)
    return jnp.where(big, _MASK_FILL, base).astype(jnp.float32)


def scaled_dot_product(q, k, v, mask):
    """Mirrors ScaledDotProduct.forward for (B, H, L, d) inputs; mask may be None
    or any boolean array broadcastable to (B, H, Lq, Lk)."""
    B, H, Lq, d_k = q.shape
    Bk, Hk, Lk, d_kk = k.shape
    assert (B, H, d_k) == (Bk, Hk, d_kk)
    assert v.shape[:3] == (B, H, Lk)
    d_v = v.shape[-1]

    q2 = q.reshape(B, H * Lq, d_k).astype(jnp.float32)
    k2 = k.reshape(B, H * Lk, d_k).astype(jnp.float32)
    v2 = v.reshape(B, H * Lk, d_v).astype(jnp.float32)
    mv = _build_maskval(mask, B, H, Lq, Lk)

    out2 = _sdp_pallas(q2, k2, v2, mv)
    return out2.reshape(B, H, Lq, d_v)


def _reference(q, k, v, mask):
    # Pure-JAX reference replicating the torch module exactly.
    d_k = q.shape[-1]
    scores = jnp.einsum("bhqd,bhkd->bhqk", q, k,
                        preferred_element_type=jnp.float32) / math.sqrt(d_k)
    if mask is not None:
        scores = jnp.where(jnp.broadcast_to(mask, scores.shape),
                           _MASK_FILL, scores)
    p = jax.nn.softmax(scores, axis=-1)
    return jnp.einsum("bhqk,bhkd->bhqd", p, v, preferred_element_type=jnp.float32)


if __name__ == "__main__":
    B, H, L, DK = 2, 4, 8, 8   # matches the transformer's D_MODEL=32 / 4 heads
    key = jax.random.PRNGKey(0)
    kq, kk, kv = jax.random.split(key, 3)
    q = jax.random.normal(kq, (B, H, L, DK), dtype=jnp.float32)
    k = jax.random.normal(kk, (B, H, L, DK), dtype=jnp.float32)
    v = jax.random.normal(kv, (B, H, L, DK), dtype=jnp.float32)
    causal = jnp.triu(jnp.ones((L, L), dtype=bool), k=1)[None, None]  # (1,1,L,L)

    # Masked path (exercises masked_fill_ semantics).
    out_m = scaled_dot_product(q, k, v, causal)
    jax.block_until_ready(out_m)
    ref_m = _reference(q, k, v, causal)
    ok_mask = bool(jnp.allclose(out_m, ref_m, atol=1e-4, rtol=1e-4))

    # mask=None path.
    out_n = scaled_dot_product(q, k, v, None)
    jax.block_until_ready(out_n)
    ref_n = _reference(q, k, v, None)
    ok_none = bool(jnp.allclose(out_n, ref_n, atol=1e-4, rtol=1e-4))

    assert out_m.shape == (B, H, L, DK)
    assert ok_mask and ok_none
    print("KERNEL_OK")
</pallas_src>

<mosaic_0001>
module attributes {stable_mosaic.version = 11 : i64} {
  func.func @sdp_kernel(%arg0: i32, %arg1: memref<1x32x8xf32, #tpu.memory_space<vmem>>, %arg2: memref<1x32x8xf32, #tpu.memory_space<vmem>>, %arg3: memref<1x32x8xf32, #tpu.memory_space<vmem>>, %arg4: memref<1x32x32xf32, #tpu.memory_space<vmem>>, %arg5: memref<1x32x8xf32, #tpu.memory_space<vmem>>) attributes {dimension_semantics = [#tpu.dimension_semantics<parallel>], iteration_bounds = array<i64: 2>, scalar_prefetch = 0 : i64, scratch_operands = 0 : i64, tpu.core_type = #tpu.core_type<tc>, window_params = [{transform_indices = @transform_0, window_bounds = array<i64: 1, 32, 8>}, {transform_indices = @transform_1, window_bounds = array<i64: 1, 32, 8>}, {transform_indices = @transform_2, window_bounds = array<i64: 1, 32, 8>}, {transform_indices = @transform_3, window_bounds = array<i64: 1, 32, 32>}, {transform_indices = @transform_4, window_bounds = array<i64: 1, 32, 8>}]} {
    %c0 = arith.constant 0 : index
    %c0_0 = arith.constant 0 : index
    %c0_1 = arith.constant 0 : index
    %0 = vector.load %arg1[%c0, %c0_0, %c0_1] : memref<1x32x8xf32, #tpu.memory_space<vmem>>, vector<1x32x8xf32>
    %1 = vector.shape_cast %0 : vector<1x32x8xf32> to vector<32x8xf32>
    %cst = arith.constant 0.353553385 : f32
    %2 = vector.broadcast %cst : f32 to vector<32x8xf32>
    %3 = arith.mulf %1, %2 : vector<32x8xf32>
    %c0_2 = arith.constant 0 : index
    %c0_3 = arith.constant 0 : index
    %c0_4 = arith.constant 0 : index
    %4 = vector.load %arg2[%c0_2, %c0_3, %c0_4] : memref<1x32x8xf32, #tpu.memory_space<vmem>>, vector<1x32x8xf32>
    %5 = vector.shape_cast %4 : vector<1x32x8xf32> to vector<32x8xf32>
    %c0_5 = arith.constant 0 : index
    %c0_6 = arith.constant 0 : index
    %c0_7 = arith.constant 0 : index
    %6 = vector.load %arg3[%c0_5, %c0_6, %c0_7] : memref<1x32x8xf32, #tpu.memory_space<vmem>>, vector<1x32x8xf32>
    %7 = vector.shape_cast %6 : vector<1x32x8xf32> to vector<32x8xf32>
    %c0_8 = arith.constant 0 : index
    %c0_9 = arith.constant 0 : index
    %c0_10 = arith.constant 0 : index
    %8 = vector.load %arg4[%c0_8, %c0_9, %c0_10] : memref<1x32x32xf32, #tpu.memory_space<vmem>>, vector<1x32x32xf32>
    %9 = vector.shape_cast %8 : vector<1x32x32xf32> to vector<32x32xf32>
    %cst_11 = arith.constant dense<0.000000e+00> : vector<32x32xf32>
    %10 = tpu.matmul %3, %5, %cst_11 {dimension_numbers = #tpu.dot_dimension_numbers<[1], [1], [0], [0], [0, 0, 1, 0], [], []>} : vector<32x8xf32>, vector<32x8xf32>, vector<32x32xf32> -> vector<32x32xf32>
    %cst_12 = arith.constant 0.000000e+00 : f32
    %11 = vector.broadcast %cst_12 : f32 to vector<32x32xf32>
    %12 = arith.cmpf one, %9, %11 : vector<32x32xf32>
    %13 = arith.select %12, %9, %10 : vector<32x32xi1>, vector<32x32xf32>
    %cst_13 = arith.constant dense<0xFF800000> : vector<32xf32>
    %14 = vector.multi_reduction <maximumf>, %13, %cst_13 [1] : vector<32x32xf32> to vector<32xf32>
    %15 = vector.shape_cast %14 : vector<32xf32> to vector<32x1xf32>
    %16 = vector.broadcast %15 : vector<32x1xf32> to vector<32x32xf32>
    %17 = arith.subf %13, %16 : vector<32x32xf32>
    %18 = math.exp %17 : vector<32x32xf32>
    %cst_14 = arith.constant dense<0.000000e+00> : vector<32xf32>
    %19 = vector.multi_reduction <add>, %18, %cst_14 [1] : vector<32x32xf32> to vector<32xf32>
    %20 = vector.shape_cast %19 : vector<32xf32> to vector<32x1xf32>
    %21 = tpu.reciprocal %20 : vector<32x1xf32> -> vector<32x1xf32>
    %22 = vector.broadcast %21 : vector<32x1xf32> to vector<32x32xf32>
    %23 = arith.mulf %18, %22 : vector<32x32xf32>
    %cst_15 = arith.constant dense<0.000000e+00> : vector<32x8xf32>
    %24 = tpu.matmul %23, %7, %cst_15 {dimension_numbers = #tpu.dot_dimension_numbers<[1], [0], [0], [1], [0, 0, 1, 1], [], []>} : vector<32x32xf32>, vector<32x8xf32>, vector<32x8xf32> -> vector<32x8xf32>
    %c0_16 = arith.constant 0 : index
    %c0_17 = arith.constant 0 : index
    %c0_18 = arith.constant 0 : index
    %25 = vector.load %arg5[%c0_16, %c0_17, %c0_18] : memref<1x32x8xf32, #tpu.memory_space<vmem>>, vector<1x32x8xf32>
    %26 = vector.shape_cast %25 : vector<1x32x8xf32> to vector<32x8xf32>
    %27 = vector.shape_cast %24 : vector<32x8xf32> to vector<1x32x8xf32>
    tpu.vector_store %arg5[%c0_16, %c0_17, %c0_18], %27 {strides = array<i32>} : memref<1x32x8xf32, #tpu.memory_space<vmem>>, vector<1x32x8xf32>,
    return
  }
  func.func @transform_0(%arg0: i32) -> (i32, i32, i32) {
    %c0_i32 = arith.constant 0 : i32
    %c0_i32_0 = arith.constant 0 : i32
    %c0_i32_1 = arith.constant 0 : i32
    return %arg0, %c0_i32, %c0_i32_0 : i32, i32, i32
  }
  func.func @transform_1(%arg0: i32) -> (i32, i32, i32) {
    %c0_i32 = arith.constant 0 : i32
    %c0_i32_0 = arith.constant 0 : i32
    %c0_i32_1 = arith.constant 0 : i32
    return %arg0, %c0_i32, %c0_i32_0 : i32, i32, i32
  }
  func.func @transform_2(%arg0: i32) -> (i32, i32, i32) {
    %c0_i32 = arith.constant 0 : i32
    %c0_i32_0 = arith.constant 0 : i32
    %c0_i32_1 = arith.constant 0 : i32
    return %arg0, %c0_i32, %c0_i32_0 : i32, i32, i32
  }
  func.func @transform_3(%arg0: i32) -> (i32, i32, i32) {
    %c0_i32 = arith.constant 0 : i32
    %c0_i32_0 = arith.constant 0 : i32
    %c0_i32_1 = arith.constant 0 : i32
    return %arg0, %c0_i32, %c0_i32_0 : i32, i32, i32
  }
  func.func @transform_4(%arg0: i32) -> (i32, i32, i32) {
    %c0_i32 = arith.constant 0 : i32
    %c0_i32_0 = arith.constant 0 : i32
    %c0_i32_1 = arith.constant 0 : i32
    return %arg0, %c0_i32, %c0_i32_0 : i32, i32, i32
  }
}

</mosaic_0001>

<llo_original>
// kernel: _sdp_pallas.1
$region0: #{_sdp_pallas.1}
  #allocation0 [shape = 'u32[]', space=smem, size = 0x4, offset = 0x4, fixed_abs, tag = 'smem constant byte address 0x4 - core index']
  #allocation1 [shape = 'u32[144,128]{1,0:T(1,128)}', space=vmem, size = 0x12000, scoped, tag = 'internal scratch']
  %s0 = inlined_call_operand.vmem [shape: f32[2,32,8], index: 0, kind: input, shape index: {}]
  %s1 = inlined_call_operand.vmem [shape: f32[2,32,8], index: 1, kind: input, shape index: {}]
  %s2 = inlined_call_operand.vmem [shape: f32[2,32,8], index: 2, kind: input, shape index: {}]
  %s3 = inlined_call_operand.vmem [shape: f32[2,32,32], index: 3, kind: input, shape index: {}]
  %s4 = inlined_call_operand.vmem [shape: f32[2,32,8], index: 4, kind: output, shape index: {}]
  %s5 = sld [smem:[#allocation0]]
  $region49: #{_sdp_pallas.1} parent=0
    _
  %s7 = ssub.s32 1, %s5
  %s8 = scalar_select 0, %s7, %s5
  loop: start=0, step=1, limit=4
  $region2: #{_sdp_pallas.1} parent=0 // loop_pre_header
    _
  $region3: #{_sdp_pallas.1} parent=0 // loop_header
    %s10 = sphi 0, %s14
    %p11 = scmp.ge.s32.totalorder %s10, 4
    %s20 = sphi 0, %s22
    %s23 = sphi 0, %s20
    %s24 = sphi 0, %s23
    %s40 = sphi 0, %s24
    %s46 = sphi 0, %s48
    %s49 = sphi 0, %s46
    %s50 = sphi 0, %s49
    %s66 = sphi 0, %s50
    %s72 = sphi 0, %s74
    %s75 = sphi 0, %s72
    %s76 = sphi 0, %s75
    %s92 = sphi 0, %s76
    %s98 = sphi 0, %s100
    %s101 = sphi 0, %s98
    %s102 = sphi 0, %s101
    %s118 = sphi 0, %s102
    %s124 = sphi 0, %s126
    %s127 = sphi 0, %s124
    %s128 = sphi 0, %s127
    %s144 = sphi 0, %s128
  $region4: #{_sdp_pallas.1} parent=0 // loop_header_branch
    %13 = sbr.rel (%p11) target = $region8
  $region5: #{_sdp_pallas.1} parent=0 // loop_body
    %s15 = ssub.s32 %s10, 1
    %s16 = ssub.s32 %s10, 2
    %s17 = sadd.s32 %s10, 1
    %s18 = ssub.s32 %s10, %s17
    %p19 = scmp.eq.s32.totalorder %s18, 0
    %s21 = sadd.s32 %s20, 1
    %s22 = scalar_select %p19, %s20, %s21
    %p25 = pneg %p19
    %p26 = scmp.eq.s32.totalorder %s10, 1
    %p27 = por %p25, %p26
    %p28 = scmp.ne.s32.totalorder %s20, %s23
    %p29 = scmp.eq.s32.totalorder %s10, 0
    %p30 = por %p28, %p29
    %p31 = scmp.ne.s32.totalorder %s20, %s23
    %p32 = scmp.eq.s32.totalorder %s15, 1
    %p33 = por %p31, %p32
    %p34 = scmp.ne.s32.totalorder %s23, %s24
    %p35 = scmp.eq.s32.totalorder %s15, 0
    %p36 = por %p34, %p35
    %p37 = scmp.ne.s32.totalorder %s23, %s24
    %p38 = scmp.eq.s32.totalorder %s16, 1
    %p39 = por %p37, %p38
    %p41 = scmp.ne.s32.totalorder %s24, %s40
    %p42 = scmp.eq.s32.totalorder %s16, 0
    %p43 = por %p41, %p42
    %s44 = ssub.s32 %s10, %s17
    %p45 = scmp.eq.s32.totalorder %s44, 0
    %s47 = sadd.s32 %s46, 1
    %s48 = scalar_select %p45, %s46, %s47
    %p51 = pneg %p45
    %p52 = scmp.eq.s32.totalorder %s10, 1
    %p53 = por %p51, %p52
    %p54 = scmp.ne.s32.totalorder %s46, %s49
    %p55 = scmp.eq.s32.totalorder %s10, 0
    %p56 = por %p54, %p55
    %p57 = scmp.ne.s32.totalorder %s46, %s49
    %p58 = scmp.eq.s32.totalorder %s15, 1
    %p59 = por %p57, %p58
    %p60 = scmp.ne.s32.totalorder %s49, %s50
    %p61 = scmp.eq.s32.totalorder %s15, 0
    %p62 = por %p60, %p61
    %p63 = scmp.ne.s32.totalorder %s49, %s50
    %p64 = scmp.eq.s32.totalorder %s16, 1
    %p65 = por %p63, %p64
    %p67 = scmp.ne.s32.totalorder %s50, %s66
    %p68 = scmp.eq.s32.totalorder %s16, 0
    %p69 = por %p67, %p68
    %s70 = ssub.s32 %s10, %s17
    %p71 = scmp.eq.s32.totalorder %s70, 0
    %s73 = sadd.s32 %s72, 1
    %s74 = scalar_select %p71, %s72, %s73
    %p77 = pneg %p71
    %p78 = scmp.eq.s32.totalorder %s10, 1
    %p79 = por %p77, %p78
    %p80 = scmp.ne.s32.totalorder %s72, %s75
    %p81 = scmp.eq.s32.totalorder %s10, 0
    %p82 = por %p80, %p81
    %p83 = scmp.ne.s32.totalorder %s72, %s75
    %p84 = scmp.eq.s32.totalorder %s15, 1
    %p85 = por %p83, %p84
    %p86 = scmp.ne.s32.totalorder %s75, %s76
    %p87 = scmp.eq.s32.totalorder %s15, 0
    %p88 = por %p86, %p87
    %p89 = scmp.ne.s32.totalorder %s75, %s76
    %p90 = scmp.eq.s32.totalorder %s16, 1
    %p91 = por %p89, %p90
    %p93 = scmp.ne.s32.totalorder %s76, %s92
    %p94 = scmp.eq.s32.totalorder %s16, 0
    %p95 = por %p93, %p94
    %s96 = ssub.s32 %s10, %s17
    %p97 = scmp.eq.s32.totalorder %s96, 0
    %s99 = sadd.s32 %s98, 1
    %s100 = scalar_select %p97, %s98, %s99
    %p103 = pneg %p97
    %p104 = scmp.eq.s32.totalorder %s10, 1
    %p105 = por %p103, %p104
    %p106 = scmp.ne.s32.totalorder %s98, %s101
    %p107 = scmp.eq.s32.totalorder %s10, 0
    %p108 = por %p106, %p107
    %p109 = scmp.ne.s32.totalorder %s98, %s101
    %p110 = scmp.eq.s32.totalorder %s15, 1
    %p111 = por %p109, %p110
    %p112 = scmp.ne.s32.totalorder %s101, %s102
    %p113 = scmp.eq.s32.totalorder %s15, 0
    %p114 = por %p112, %p113
    %p115 = scmp.ne.s32.totalorder %s101, %s102
    %p116 = scmp.eq.s32.totalorder %s16, 1
    %p117 = por %p115, %p116
    %p119 = scmp.ne.s32.totalorder %s102, %s118
    %p120 = scmp.eq.s32.totalorder %s16, 0
    %p121 = por %p119, %p120
    %s122 = ssub.s32 %s10, %s17
    %p123 = scmp.eq.s32.totalorder %s122, 0
    %s125 = sadd.s32 %s124, 1
    %s126 = scalar_select %p123, %s124, %s125
    %p129 = pneg %p123
    %p130 = scmp.eq.s32.totalorder %s10, 1
    %p131 = por %p129, %p130
    %p132 = scmp.ne.s32.totalorder %s124, %s127
    %p133 = scmp.eq.s32.totalorder %s10, 0
    %p134 = por %p132, %p133
    %p135 = scmp.ne.s32.totalorder %s124, %s127
    %p136 = scmp.eq.s32.totalorder %s15, 1
    %p137 = por %p135, %p136
    %p138 = scmp.ne.s32.totalorder %s127, %s128
    %p139 = scmp.eq.s32.totalorder %s15, 0
    %p140 = por %p138, %p139
    %p141 = scmp.ne.s32.totalorder %s127, %s128
    %p142 = scmp.eq.s32.totalorder %s16, 1
    %p143 = por %p141, %p142
    %p145 = scmp.ne.s32.totalorder %s128, %s144
    %p146 = scmp.eq.s32.totalorder %s16, 0
    %p147 = por %p145, %p146
    %p148 = scmp.le.s32.totalorder 1, %s10
    %p149 = scmp.lt.s32.totalorder %s10, 3
    %p150 = pnand %p148, %p149
    %p151 = pneg %p150
    // Predicated region
    $region9: #{_sdp_pallas.1} parent=5 // pred_check
      _
    $region10: #{_sdp_pallas.1} parent=5 // pred_check_branch
      %153 = sbr.rel (%p150) target = $region12
    $region11: #{_sdp_pallas.1} parent=5 // pred_region
      %s154 = ssub.s32 %s10, 1
    $region12: #{_sdp_pallas.1} parent=5 // pred_fallthru
      _
    %p155 = scmp.lt.s32.totalorder %s10, 2
    // Predicated region
    $region13: #{_sdp_pallas.1} parent=5 // pred_check
      %p156 = pneg %p155
    $region14: #{_sdp_pallas.1} parent=5 // pred_check_branch
      %158 = sbr.rel (%p156) target = $region16
    $region15: #{_sdp_pallas.1} parent=5 // pred_region
      // Predicated region
      $region17: #{_sdp_pallas.1} parent=15 // pred_check
        %p159 = pneg %p30
      $region18: #{_sdp_pallas.1} parent=15 // pred_check_branch
        %161 = sbr.rel (%p159) target = $region20
      $region19: #{_sdp_pallas.1} parent=15 // pred_region
        %p162 = scmp.lt.s32.totalorder %s10, 1
        %s163 = scalar_select %p162, %s10, 1
        %s164 = smul.addr %s163, 4
        %s165 = smul.addr %s164, 8
        %s166 = scalar_lea.vmem %s0, %s165
      $region20: #{_sdp_pallas.1} parent=15 // pred_fallthru
        _
      // Predicated region
      $region21: #{_sdp_pallas.1} parent=15 // pred_check
        %p167 = pneg %p56
      $region22: #{_sdp_pallas.1} parent=15 // pred_check_branch
        %169 = sbr.rel (%p167) target = $region24
      $region23: #{_sdp_pallas.1} parent=15 // pred_region
        %p170 = scmp.lt.s32.totalorder %s10, 1
        %s171 = scalar_select %p170, %s10, 1
        %s172 = smul.addr %s171, 4
        %s173 = smul.addr %s172, 8
        %s174 = scalar_lea.vmem %s1, %s173
      $region24: #{_sdp_pallas.1} parent=15 // pred_fallthru
        _
      // Predicated region
      $region25: #{_sdp_pallas.1} parent=15 // pred_check
        %p175 = pneg %p82
      $region26: #{_sdp_pallas.1} parent=15 // pred_check_branch
        %177 = sbr.rel (%p175) target = $region28
      $region27: #{_sdp_pallas.1} parent=15 // pred_region
        %p178 = scmp.lt.s32.totalorder %s10, 1
        %s179 = scalar_select %p178, %s10, 1
        %s180 = smul.addr %s179, 4
        %s181 = smul.addr %s180, 8
        %s182 = scalar_lea.vmem %s2, %s181
      $region28: #{_sdp_pallas.1} parent=15 // pred_fallthru
        _
      // Predicated region
      $region29: #{_sdp_pallas.1} parent=15 // pred_check
        %p183 = pneg %p108
      $region30: #{_sdp_pallas.1} parent=15 // pred_check_branch
        %185 = sbr.rel (%p183) target = $region32
      $region31: #{_sdp_pallas.1} parent=15 // pred_region
        %p186 = scmp.lt.s32.totalorder %s10, 1
        %s187 = scalar_select %p186, %s10, 1
        %s188 = smul.addr %s187, 4
        %s189 = smul.addr %s188, 8
        %s190 = scalar_lea.vmem %s3, %s189
      $region32: #{_sdp_pallas.1} parent=15 // pred_fallthru
        _
    $region16: #{_sdp_pallas.1} parent=5 // pred_fallthru
      _
    %p191 = scmp.le.s32.totalorder 1, %s10
    %p192 = scmp.lt.s32.totalorder %s10, 3
    %p193 = pnand %p191, %p192
    %p194 = pneg %p193
    // Predicated region
    $region33: #{_sdp_pallas.1} parent=5 // pred_check
      _
    $region34: #{_sdp_pallas.1} parent=5 // pred_check_branch
      %196 = sbr.rel (%p193) target = $region36
    $region35: #{_sdp_pallas.1} parent=5 // pred_region
      %s197 = ssub.s32 %s10, 1
      %p198 = scmp.lt.s32.totalorder %s15, 1
      %s199 = scalar_select %p198, %s15, 1
      %s200 = smul.addr %s199, 4
      %s201 = smul.addr %s200, 8
      %s202 = scalar_lea.vmem %s0, %s201
      %p203 = pneg %p36
      %p204 = pneg %p33
      %p205 = scmp.lt.s32.totalorder %s15, 1
      %s206 = scalar_select %p205, %s15, 1
      %s207 = smul.addr %s206, 4
      %s208 = smul.addr %s207, 8
      %s209 = scalar_lea.vmem %s1, %s208
      %p210 = pneg %p62
      %p211 = pneg %p59
      %p212 = scmp.lt.s32.totalorder %s15, 1
      %s213 = scalar_select %p212, %s15, 1
      %s214 = smul.addr %s213, 4
      %s215 = smul.addr %s214, 8
      %s216 = scalar_lea.vmem %s2, %s215
      %p217 = pneg %p88
      %p218 = pneg %p85
      %p219 = scmp.lt.s32.totalorder %s15, 1
      %s220 = scalar_select %p219, %s15, 1
      %s221 = smul.addr %s220, 4
      %s222 = smul.addr %s221, 8
      %s223 = scalar_lea.vmem %s3, %s222
      %p224 = pneg %p114
      %p225 = pneg %p111
      %p226 = pneg %p140
      %p227 = pneg %p137
      %p228 = scmp.lt.s32.totalorder %s15, 1
      %s229 = scalar_select %p228, %s15, 1
      %s230 = smul.addr %s229, 4
      %s231 = smul.addr %s230, 8
      %s232 = scalar_lea.vmem %s4, %s231
      %p233 = scmp.lt.s32.totalorder %s15, 1
      %s234 = scalar_select %p233, %s15, 1
      %s235 = smul.addr %s234, 4
      %s236 = smul.addr %s235, 8
      %s237 = scalar_lea.vmem %s0, %s236
      %p238 = scmp.lt.s32.totalorder %s15, 1
      %s239 = scalar_select %p238, %s15, 1
      %s240 = smul.addr %s239, 4
      %s241 = smul.addr %s240, 8
      %s242 = scalar_lea.vmem %s1, %s241
      %p243 = scmp.lt.s32.totalorder %s15, 1
      %s244 = scalar_select %p243, %s15, 1
      %s245 = smul.addr %s244, 4
      %s246 = smul.addr %s245, 8
      %s247 = scalar_lea.vmem %s2, %s246
      %p248 = scmp.lt.s32.totalorder %s15, 1
      %s249 = scalar_select %p248, %s15, 1
      %s250 = smul.addr %s249, 4
      %s251 = smul.addr %s250, 8
      %s252 = scalar_lea.vmem %s3, %s251
      %p253 = scmp.lt.s32.totalorder %s15, 1
      %s254 = scalar_select %p253, %s15, 1
      %s255 = smul.addr %s254, 4
      %s256 = smul.addr %s255, 8
      %s257 = scalar_lea.vmem %s4, %s256
      %v258 = vld [vmem:[%s237] sm:$0xff]
      %v259 = vld [vmem:[%s237 + $0x8] sm:$0xff]
      %v260 = vld [vmem:[%s237 + $0x10] sm:$0xff]
      %v261 = vld [vmem:[%s237 + $0x18] sm:$0xff]
      %v262 = vmul.f32 %v258, 0.35355338
      %v263 = vmul.f32 %v259, 0.35355338
      %v264 = vmul.f32 %v260, 0.35355338
      %v265 = vmul.f32 %v261, 0.35355338
      %v266 = vld [vmem:[%s242] sm:$0xff]
      %v267 = vld [vmem:[%s242 + $0x8] sm:$0xff]
      %v268 = vld [vmem:[%s242 + $0x10] sm:$0xff]
      %v269 = vld [vmem:[%s242 + $0x18] sm:$0xff]
      %v270 = vld [vmem:[%s247] sm:$0xff]
      %v271 = vld [vmem:[%s247 + $0x8] sm:$0xff]
      %v272 = vld [vmem:[%s247 + $0x10] sm:$0xff]
      %v273 = vld [vmem:[%s247 + $0x18] sm:$0xff]
      %v274 = vld [vmem:[%s252] sm:$0xff]
      %v275 = vld [vmem:[%s252 + $0x8] sm:$0xff]
      %v276 = vld [vmem:[%s252 + $0x10] sm:$0xff]
      %v277 = vld [vmem:[%s252 + $0x18] sm:$0xff]
      %vm278 = vcmask 64512
      %v280 = vsel %vm278, %v262, 0
      %v283 = vsel %vm278, %v263, 0
      %v286 = vsel %vm278, %v264, 0
      %v289 = vsel %vm278, %v265, 0
      %v292 = vsel %vm278, %v266, 0
      %v295 = vsel %vm278, %v267, 0
      %v298 = vsel %vm278, %v268, 0
      %v301 = vsel %vm278, %v269, 0
      %303 = vmatprep.subr.mxu0 0.0
      %304 = vmatpush1.xpose.msra.mxu0 0.0
      %305 = vmatprep.subr.mxu0 0.0
      %306 = vmatpush1.xpose.msra.mxu0 0.0
      %307 = vmatprep.subr.mxu0 0.0
      %308 = vmatpush1.xpose.msra.mxu0 0.0
      %309 = vmatprep.subr.mxu0 0.0
      %310 = vmatpush1.xpose.msra.mxu0 0.0
      %311 = vmatprep.subr.mxu0 0.0
      %312 = vmatpush1.xpose.msra.mxu0 0.0
      %313 = vmatprep.subr.mxu0 0.0
      %314 = vmatpush1.xpose.msra.mxu0 0.0
      %315 = vmatprep.subr.mxu0 0.0
      %316 = vmatpush1.xpose.msra.mxu0 0.0
      %317 = vmatprep.subr.mxu0 0.0
      %318 = vmatpush1.xpose.msra.mxu0 0.0
      %319 = vmatprep.subr.mxu0 0.0
      %320 = vmatpush1.xpose.msra.mxu0 0.0
      %321 = vmatprep.subr.mxu0 0.0
      %322 = vmatpush1.xpose.msra.mxu0 0.0
      %323 = vmatprep.subr.mxu0 0.0
      %324 = vmatpush1.xpose.msra.mxu0 0.0
      %325 = vmatprep.subr.mxu0 0.0
      %326 = vmatpush1.xpose.msra.mxu0 0.0
      %327 = vmatprep.subr.mxu0 0.0
      %328 = vmatpush1.xpose.msra.mxu0 %v301
      %329 = vmatprep.subr.mxu0 0.0
      %330 = vmatpush1.xpose.msra.mxu0 %v298
      %331 = vmatprep.subr.mxu0 0.0
      %332 = vmatpush1.xpose.msra.mxu0 %v295
      %333 = vmatprep.subr.mxu0 0.0
      %334 = vmatpush1.xpose.msra.mxu0 %v292
      %335 = vmatprep.subr.mxu0 0.0
      %336 = vmatpush2.xpose.msra.mxu0 0.0
      %337 = vmatprep.subr.mxu0 0.0
      %338 = vmatpush2.xpose.msra.mxu0 0.0
      %339 = vmatprep.subr.mxu0 0.0
      %340 = vmatpush2.xpose.msra.mxu0 0.0
      %341 = vmatprep.subr.mxu0 0.0
      %342 = vmatpush2.xpose.msra.mxu0 0.0
      %343 = vmatprep.subr.mxu0 0.0
      %344 = vmatpush2.xpose.msra.mxu0 0.0
      %345 = vmatprep.subr.mxu0 0.0
      %346 = vmatpush2.xpose.msra.mxu0 0.0
      %347 = vmatprep.subr.mxu0 0.0
      %348 = vmatpush2.xpose.msra.mxu0 0.0
      %349 = vmatprep.subr.mxu0 0.0
      %350 = vmatpush2.xpose.msra.mxu0 0.0
      %351 = vmatprep.subr.mxu0 0.0
      %352 = vmatpush2.xpose.msra.mxu0 0.0
      %353 = vmatprep.subr.mxu0 0.0
      %354 = vmatpush2.xpose.msra.mxu0 0.0
      %355 = vmatprep.subr.mxu0 0.0
      %356 = vmatpush2.xpose.msra.mxu0 0.0
      %357 = vmatprep.subr.mxu0 0.0
      %358 = vmatpush2.xpose.msra.mxu0 0.0
      %359 = vmatprep.subr.mxu0 0.0
      %360 = vmatpush2.xpose.msra.mxu0 0.0
      %361 = vmatprep.subr.mxu0 0.0
      %362 = vmatpush2.xpose.msra.mxu0 0.0
      %363 = vmatprep.subr.mxu0 0.0
      %364 = vmatpush2.xpose.msra.mxu0 0.0
      %365 = vmatprep.subr.mxu0 0.0
      %366 = vmatpush2.xpose.msra.mxu0 0.0
      %367 = vmatprep.mubr.f32.mxu0 0.0
      %368 = vmatmul.mubr.f32.gmra.mxu0 %v280
      %v369 = vpop.f32.mrf.mxu0
      %v370 = vadd.f32 0.0, %v369
      %v371 = vpop.f32.mrf.mxu0
      %372 = vmatprep.mubr.f32.mxu0 0.0
      %373 = vmatmul.mubr.f32.gmra.mxu0 %v283
      %v374 = vpop.f32.mrf.mxu0
      %v375 = vadd.f32 0.0, %v374
      %v376 = vpop.f32.mrf.mxu0
      %377 = vmatprep.mubr.f32.mxu0 0.0
      %378 = vmatmul.mubr.f32.gmra.mxu0 %v286
      %v379 = vpop.f32.mrf.mxu0
      %v380 = vadd.f32 0.0, %v379
      %v381 = vpop.f32.mrf.mxu0
      %382 = vmatprep.mubr.f32.mxu0 0.0
      %383 = vmatmul.mubr.f32.gmra.mxu0 %v289
      %v384 = vpop.f32.mrf.mxu0
      %v385 = vadd.f32 0.0, %v384
      %v386 = vpop.f32.mrf.mxu0
      %387 = vdwg.mxu0
      %vm388 = vcmp.ne.f32.partialorder %v274, 0.0
      %vm389 = vcmp.ne.f32.partialorder %v275, 0.0
      %vm390 = vcmp.ne.f32.partialorder %v276, 0.0
      %vm391 = vcmp.ne.f32.partialorder %v277, 0.0
      %v392 = vsel %vm388, %v274, %v370
      %v393 = vsel %vm389, %v275, %v375
      %v394 = vsel %vm390, %v276, %v380
      %v395 = vsel %vm391, %v277, %v385
      %vm396 = vcmask 261120
      %v397 = vsel %vm396, %v392, -inf
      %398 = vmax.xlane.f32.xlu0 %v397
      %v399 = vpop.xlane.xlu0 %398
      %v400 = vsel %vm396, %v393, -inf
      %401 = vmax.xlane.f32.xlu0 %v400
      %v402 = vpop.xlane.xlu0 %401
      %v403 = vsel %vm396, %v394, -inf
      %404 = vmax.xlane.f32.xlu0 %v403
      %v405 = vpop.xlane.xlu0 %404
      %v406 = vsel %vm396, %v395, -inf
      %407 = vmax.xlane.f32.xlu0 %v406
      %v408 = vpop.xlane.xlu0 %407
      %v409 = vsub.f32 %v392, %v399
      %v410 = vsub.f32 %v393, %v402
      %v411 = vsub.f32 %v394, %v405
      %v412 = vsub.f32 %v395, %v408
      %v413 = vmul.f32 %v409, 1.442695
      %v414 = vpow.pop %v413
      %v415 = vmul.f32 %v410, 1.442695
      %v416 = vpow.pop %v415
      %v417 = vmul.f32 %v411, 1.442695
      %v418 = vpow.pop %v417
      %v419 = vmul.f32 %v412, 1.442695
      %v420 = vpow.pop %v419
      %v421 = vsel %vm396, %v414, 0.0
      %422 = vadd.xlane.f32.xlu0 %v421
      %v423 = vpop.xlane.xlu0 %422
      %v424 = vsel %vm396, %v416, 0.0
      %425 = vadd.xlane.f32.xlu0 %v424
      %v426 = vpop.xlane.xlu0 %425
      %v427 = vsel %vm396, %v418, 0.0
      %428 = vadd.xlane.f32.xlu0 %v427
      %v429 = vpop.xlane.xlu0 %428
      %v430 = vsel %vm396, %v420, 0.0
      %431 = vadd.xlane.f32.xlu0 %v430
      %v432 = vpop.xlane.xlu0 %431
      %v433 = vrcp.pop %v423
      %v434 = vrcp.pop %v426
      %v435 = vrcp.pop %v429
      %v436 = vrcp.pop %v432
      %v437 = vmul.f32 %v414, %v433
      %v438 = vmul.f32 %v416, %v434
      %v439 = vmul.f32 %v418, %v435
      %v440 = vmul.f32 %v420, %v436
      %v442 = vsel %vm396, %v437, 0
      %v445 = vsel %vm396, %v438, 0
      %v448 = vsel %vm396, %v439, 0
      %v451 = vsel %vm396, %v440, 0
      %453 = vmatprep.subr.mxu0 0.0
      %454 = vmatpush1.msra.mxu0 0.0
      %455 = vmatprep.subr.mxu0 0.0
      %456 = vmatpush1.msra.mxu0 0.0
      %457 = vmatprep.subr.mxu0 0.0
      %458 = vmatpush1.msra.mxu0 0.0
      %459 = vmatprep.subr.mxu0 0.0
      %460 = vmatpush1.msra.mxu0 0.0
      %461 = vmatprep.subr.mxu0 0.0
      %462 = vmatpush1.msra.mxu0 0.0
      %463 = vmatprep.subr.mxu0 0.0
      %464 = vmatpush1.msra.mxu0 0.0
      %465 = vmatprep.subr.mxu0 0.0
      %466 = vmatpush1.msra.mxu0 0.0
      %467 = vmatprep.subr.mxu0 0.0
      %468 = vmatpush1.msra.mxu0 0.0
      %469 = vmatprep.subr.mxu0 0.0
      %470 = vmatpush1.msra.mxu0 0.0
      %471 = vmatprep.subr.mxu0 0.0
      %472 = vmatpush1.msra.mxu0 0.0
      %473 = vmatprep.subr.mxu0 0.0
      %474 = vmatpush1.msra.mxu0 0.0
      %475 = vmatprep.subr.mxu0 0.0
      %476 = vmatpush1.msra.mxu0 0.0
      %477 = vmatprep.subr.mxu0 0.0
      %478 = vmatpush1.msra.mxu0 %v273
      %479 = vmatprep.subr.mxu0 0.0
      %480 = vmatpush1.msra.mxu0 %v272
      %481 = vmatprep.subr.mxu0 0.0
      %482 = vmatpush1.msra.mxu0 %v271
      %483 = vmatprep.subr.mxu0 0.0
      %484 = vmatpush1.msra.mxu0 %v270
      %485 = vmatprep.subr.mxu0 0.0
      %486 = vmatpush2.msra.mxu0 0.0
      %487 = vmatprep.subr.mxu0 0.0
      %488 = vmatpush2.msra.mxu0 0.0
      %489 = vmatprep.subr.mxu0 0.0
      %490 = vmatpush2.msra.mxu0 0.0
      %491 = vmatprep.subr.mxu0 0.0
      %492 = vmatpush2.msra.mxu0 0.0
      %493 = vmatprep.subr.mxu0 0.0
      %494 = vmatpush2.msra.mxu0 0.0
      %495 = vmatprep.subr.mxu0 0.0
      %496 = vmatpush2.msra.mxu0 0.0
      %497 = vmatprep.subr.mxu0 0.0
      %498 = vmatpush2.msra.mxu0 0.0
      %499 = vmatprep.subr.mxu0 0.0
      %500 = vmatpush2.msra.mxu0 0.0
      %501 = vmatprep.subr.mxu0 0.0
      %502 = vmatpush2.msra.mxu0 0.0
      %503 = vmatprep.subr.mxu0 0.0
      %504 = vmatpush2.msra.mxu0 0.0
      %505 = vmatprep.subr.mxu0 0.0
      %506 = vmatpush2.msra.mxu0 0.0
      %507 = vmatprep.subr.mxu0 0.0
      %508 = vmatpush2.msra.mxu0 0.0
      %509 = vmatprep.subr.mxu0 0.0
      %510 = vmatpush2.msra.mxu0 0.0
      %511 = vmatprep.subr.mxu0 0.0
      %512 = vmatpush2.msra.mxu0 0.0
      %513 = vmatprep.subr.mxu0 0.0
      %514 = vmatpush2.msra.mxu0 0.0
      %515 = vmatprep.subr.mxu0 0.0
      %516 = vmatpush2.msra.mxu0 0.0
      %517 = vmatprep.mubr.f32.mxu0 0.0
      %518 = vmatmul.mubr.f32.gmra.mxu0 %v442
      %v519 = vpop.f32.mrf.mxu0
      %v520 = vadd.f32 0.0, %v519
      %v521 = vpop.f32.mrf.mxu0
      %522 = vmatprep.mubr.f32.mxu0 0.0
      %523 = vmatmul.mubr.f32.gmra.mxu0 %v445
      %v524 = vpop.f32.mrf.mxu0
      %v525 = vadd.f32 0.0, %v524
      %v526 = vpop.f32.mrf.mxu0
      %527 = vmatprep.mubr.f32.mxu0 0.0
      %528 = vmatmul.mubr.f32.gmra.mxu0 %v448
      %v529 = vpop.f32.mrf.mxu0
      %v530 = vadd.f32 0.0, %v529
      %v531 = vpop.f32.mrf.mxu0
      %532 = vmatprep.mubr.f32.mxu0 0.0
      %533 = vmatmul.mubr.f32.gmra.mxu0 %v451
      %v534 = vpop.f32.mrf.mxu0
      %v535 = vadd.f32 0.0, %v534
      %v536 = vpop.f32.mrf.mxu0
      %537 = vdwg.mxu0
      %538 = vst.msk [vmem:[%s257] sm:$0xff] %vm278, %v520
      %539 = vst.msk [vmem:[%s257 + $0x8] sm:$0xff] %vm278, %v525
      %540 = vst.msk [vmem:[%s257 + $0x10] sm:$0xff] %vm278, %v530
      %541 = vst.msk [vmem:[%s257 + $0x18] sm:$0xff] %vm278, %v535
      %p542 = scmp.lt.s32.totalorder %s15, 1
      %s543 = scalar_select %p542, %s15, 1
      %s544 = smul.addr %s543, 4
      %s545 = smul.addr %s544, 8
      %s546 = scalar_lea.vmem %s4, %s545
      // Predicated region
      $region37: #{_sdp_pallas.1} parent=35 // pred_check
        %p547 = pneg %p137
      $region38: #{_sdp_pallas.1} parent=35 // pred_check_branch
        %549 = sbr.rel (%p547) target = $region40
      $region39: #{_sdp_pallas.1} parent=35 // pred_region
        _
      $region40: #{_sdp_pallas.1} parent=35 // pred_fallthru
        _
    $region36: #{_sdp_pallas.1} parent=5 // pred_fallthru
      _
    %p550 = scmp.le.s32.totalorder 2, %s10
    // Predicated region
    $region41: #{_sdp_pallas.1} parent=5 // pred_check
      %p551 = pneg %p550
    $region42: #{_sdp_pallas.1} parent=5 // pred_check_branch
      %553 = sbr.rel (%p551) target = $region44
    $region43: #{_sdp_pallas.1} parent=5 // pred_region
      %s554 = ssub.s32 %s10, 2
      // Predicated region
      $region45: #{_sdp_pallas.1} parent=43 // pred_check
        %p555 = pneg %p143
      $region46: #{_sdp_pallas.1} parent=43 // pred_check_branch
        %557 = sbr.rel (%p555) target = $region48
      $region47: #{_sdp_pallas.1} parent=43 // pred_region
        %p558 = scmp.lt.s32.totalorder %s16, 1
        %s559 = scalar_select %p558, %s16, 1
        %s560 = smul.addr %s559, 4
        %s561 = smul.addr %s560, 8
        %s562 = scalar_lea.vmem %s4, %s561
      $region48: #{_sdp_pallas.1} parent=43 // pred_fallthru
        _
    $region44: #{_sdp_pallas.1} parent=5 // pred_fallthru
      _
  $region6: #{_sdp_pallas.1} parent=0 // loop_footer
    %s14 = sadd.s32 1, %s10
  $region7: #{_sdp_pallas.1} parent=0 // loop_footer_branch
    %9 = sbr.rel target = $region3
  $region8: #{_sdp_pallas.1} parent=0 // loop_exit
    _

</llo_original>
